<compile_context>
chip_gen: v7x
topology: tpu7x:2x2x1
jax: 0.10.0
libtpu: 0.0.40
codegen_flags: <defaults>
</compile_context>

<pallas_src>
import jax
import jax.numpy as jnp
from jax.experimental import pallas as pl
from jax.experimental.pallas import tpu as pltpu


def _round_up(a: int, b: int) -> int:
    return ((a + b - 1) // b) * b


def ll_vcap_kernel(x_ref, a_ref, wout_ref, bout_ref, o_ref):
    # x_ref:    (4, TM)  rows = [x0; x1; x2; 1], TM lanes of samples
    # a_ref:    (H, 4)   folded (vcap stand-in + Infin_linear) weights + bias
    # wout_ref: (1, H)   Outfin_linear weight
    # bout_ref: (1,)     Outfin_linear bias (SMEM scalar)
    # o_ref:    (1, TM)
    h = jnp.dot(a_ref[...], x_ref[...], preferred_element_type=jnp.float32)
    h = jnp.maximum(h, 0.0)                                   # ReLU
    y = jnp.dot(wout_ref[...], h, preferred_element_type=jnp.float32) + bout_ref[0]
    o_ref[...] = y


def ll_vcap_forward(x, w_vcap, b_vcap, w_in, b_in, w_out, b_out, *, lane_tile=512):
    """x: (B, N, F_in>=3, T) -> (B, N, 1), matching LL_Vcap.forward."""
    B, N, F, T = x.shape
    assert F >= 3, "LL_Vcap.forward reads features 0..2"
    M = B * N
    H = w_in.shape[0]                                         # hidden = 10

    # Only the last timestep contributes to output[:, :, :, -1]; every op on the
    # path is applied per-timestep, so compute just t = T-1.
    x_last = x[:, :, :3, -1].astype(jnp.float32)              # (B, N, 3)
    x_lm = x_last.reshape(M, 3).T                             # (3, M) -- samples on lanes
    x_aug = jnp.concatenate([x_lm, jnp.ones((1, M), jnp.float32)], axis=0)  # (4, M)

    # Fold vcap stand-in + Infin_linear (and both biases) into one (H, 4) map:
    #   h_pre = W_in @ [x0 ; Wv@[x1;x2] + bv] + b_in  =  A_aug @ [x0; x1; x2; 1]
    a0 = w_in[:, 0:1]                                         # (H, 1)  * x0
    a12 = w_in[:, 1:2] * w_vcap                               # (H, 2)  * [x1, x2]
    a_b = w_in[:, 1:2] * b_vcap[None, :] + b_in[:, None]      # (H, 1)  * 1
    a_aug = jnp.concatenate([a0, a12, a_b], axis=1).astype(jnp.float32)   # (H, 4)

    # Lane padding: last dim a multiple of 128 (unmasked stores, full vreg lanes).
    tile_m = lane_tile if M >= lane_tile else _round_up(M, 128)
    Mp = _round_up(M, tile_m)
    x_pad = jnp.pad(x_aug, ((0, 0), (0, Mp - M)))

    cost = pl.CostEstimate(
        flops=2 * (H * 4 + H) * Mp,
        transcendentals=0,
        bytes_accessed=4 * (4 * Mp + Mp + H * 4 + H + 1),
    )

    out = pl.pallas_call(
        ll_vcap_kernel,
        out_shape=jax.ShapeDtypeStruct((1, Mp), jnp.float32),
        grid=(Mp // tile_m,),
        in_specs=[
            pl.BlockSpec((4, tile_m), lambda i: (0, i)),       # lane-dense samples
            pl.BlockSpec((H, 4), lambda i: (0, 0)),            # folded weights (resident)
            pl.BlockSpec((1, H), lambda i: (0, 0)),            # output weights (resident)
            pl.BlockSpec(memory_space=pltpu.MemorySpace.SMEM), # scalar output bias
        ],
        out_specs=pl.BlockSpec((1, tile_m), lambda i: (0, i)),
        compiler_params=pltpu.CompilerParams(
            dimension_semantics=("parallel",)),
        cost_estimate=cost,
    )(x_pad, a_aug, w_out.astype(jnp.float32), b_out.astype(jnp.float32))

    return out[0, :M].reshape(B, N, 1)


def ll_vcap_reference(x, w_vcap, b_vcap, w_in, b_in, w_out, b_out):
    """Pure-JAX reference mirroring the PyTorch LL_Vcap.forward structure
    (all timesteps computed, last one sliced at the end)."""
    x = x.astype(jnp.float32)
    x1 = x[:, :, 0:1, :]                                           # (B, N, 1, T)
    x2 = x[:, :, 1:3, :]                                           # (B, N, 2, T)
    # vcap stand-in (VcapModel undefined in spec): per-timestep linear 2 -> 1
    v = jnp.einsum('of,bnft->bnot', w_vcap, x2) + b_vcap[None, None, :, None]
    xc = jnp.concatenate([x1, v], axis=2)                          # (B, N, 2, T)
    h = jnp.einsum('of,bnft->bnot', w_in, xc) + b_in[None, None, :, None]
    h = jnp.maximum(h, 0.0)
    y = jnp.einsum('of,bnft->bnot', w_out, h) + b_out[None, None, :, None]
    return y[:, :, :, -1]                                          # (B, N, 1)


if __name__ == "__main__":
    # Small shapes consistent with LL_Vcap: x is (B, N_nodes, F_in, T_in), F_in >= 3.
    B, N, F_in, T = 2, 16, 3, 8

    key = jax.random.PRNGKey(0)
    kx, k1, k2, k3, k4, k5, k6 = jax.random.split(key, 7)

    def linear_init(kw, kb, fan_in, fan_out):
        bound = 1.0 / (fan_in ** 0.5)
        w = jax.random.uniform(kw, (fan_out, fan_in), jnp.float32, -bound, bound)
        b = jax.random.uniform(kb, (fan_out,), jnp.float32, -bound, bound)
        return w, b

    x = jax.random.normal(kx, (B, N, F_in, T), dtype=jnp.float32)

    w_vcap, b_vcap = linear_init(k1, k2, 2, 1)    # VcapModel(1, 1) stand-in
    w_in, b_in = linear_init(k3, k4, 2, 10)       # Infin_linear = Linear_self(2, 10)
    w_out, b_out = linear_init(k5, k6, 10, 1)     # Outfin_linear = Linear_self(10, 1)

    out = jax.jit(ll_vcap_forward)(x, w_vcap, b_vcap, w_in, b_in, w_out, b_out)
    out = jax.block_until_ready(out)

    ref = ll_vcap_reference(x, w_vcap, b_vcap, w_in, b_in, w_out, b_out)
    assert out.shape == (B, N, 1), out.shape
    assert jnp.allclose(out, ref, atol=1e-5, rtol=1e-5), "mismatch vs reference"

    print("KERNEL_OK")
</pallas_src>

<mosaic_0001>
module attributes {stable_mosaic.version = 11 : i64} {
  func.func @ll_vcap_kernel(%arg0: i32, %arg1: memref<4x128xf32, #tpu.memory_space<vmem>>, %arg2: memref<10x4xf32, #tpu.memory_space<vmem>>, %arg3: memref<1x10xf32, #tpu.memory_space<vmem>>, %arg4: memref<1xf32, #tpu.memory_space<smem>>, %arg5: memref<1x128xf32, #tpu.memory_space<vmem>>) attributes {dimension_semantics = [#tpu.dimension_semantics<parallel>], iteration_bounds = array<i64: 1>, scalar_prefetch = 0 : i64, scratch_operands = 0 : i64, tpu.core_type = #tpu.core_type<tc>, window_params = [{transform_indices = @transform_0, window_bounds = array<i64: 4, 128>}, {pipeline_mode = #tpu.pipeline_mode<synchronous>, transform_indices = @transform_1, window_bounds = array<i64: 10, 4>}, {pipeline_mode = #tpu.pipeline_mode<synchronous>, transform_indices = @transform_2, window_bounds = array<i64: 1, 10>}, {transform_indices = @transform_3, window_bounds = array<i64: 1>}, {transform_indices = @transform_4, window_bounds = array<i64: 1, 128>}]} {
    %c0 = arith.constant 0 : index
    %c0_0 = arith.constant 0 : index
    %0 = vector.load %arg2[%c0, %c0_0] : memref<10x4xf32, #tpu.memory_space<vmem>>, vector<10x4xf32>
    %c0_1 = arith.constant 0 : index
    %c0_2 = arith.constant 0 : index
    %1 = vector.load %arg1[%c0_1, %c0_2] : memref<4x128xf32, #tpu.memory_space<vmem>>, vector<4x128xf32>
    %cst = arith.constant dense<0.000000e+00> : vector<10x128xf32>
    %2 = tpu.matmul %0, %1, %cst {dimension_numbers = #tpu.dot_dimension_numbers<[1], [0], [0], [1], [0, 0, 1, 1], [], []>} : vector<10x4xf32>, vector<4x128xf32>, vector<10x128xf32> -> vector<10x128xf32>
    %cst_3 = arith.constant 0.000000e+00 : f32
    %3 = vector.broadcast %cst_3 : f32 to vector<10x128xf32>
    %4 = arith.maximumf %2, %3 : vector<10x128xf32>
    %c0_4 = arith.constant 0 : index
    %c0_5 = arith.constant 0 : index
    %5 = vector.load %arg3[%c0_4, %c0_5] : memref<1x10xf32, #tpu.memory_space<vmem>>, vector<1x10xf32>
    %cst_6 = arith.constant dense<0.000000e+00> : vector<1x128xf32>
    %6 = tpu.matmul %5, %4, %cst_6 {dimension_numbers = #tpu.dot_dimension_numbers<[1], [0], [0], [1], [0, 0, 1, 1], [], []>} : vector<1x10xf32>, vector<10x128xf32>, vector<1x128xf32> -> vector<1x128xf32>
    %c0_7 = arith.constant 0 : index
    %7 = memref.load %arg4[%c0_7] : memref<1xf32, #tpu.memory_space<smem>>
    %8 = vector.broadcast %7 : f32 to vector<1x128xf32>
    %9 = arith.addf %6, %8 : vector<1x128xf32>
    %c0_8 = arith.constant 0 : index
    %c0_9 = arith.constant 0 : index
    %10 = vector.load %arg5[%c0_8, %c0_9] : memref<1x128xf32, #tpu.memory_space<vmem>>, vector<1x128xf32>
    tpu.vector_store %arg5[%c0_8, %c0_9], %9 {strides = array<i32>} : memref<1x128xf32, #tpu.memory_space<vmem>>, vector<1x128xf32>,
    return
  }
  func.func @transform_0(%arg0: i32) -> (i32, i32) {
    %c0_i32 = arith.constant 0 : i32
    %c0_i32_0 = arith.constant 0 : i32
    return %c0_i32, %arg0 : i32, i32
  }
  func.func @transform_1(%arg0: i32) -> (i32, i32) {
    %c0_i32 = arith.constant 0 : i32
    %c0_i32_0 = arith.constant 0 : i32
    %c0_i32_1 = arith.constant 0 : i32
    return %c0_i32, %c0_i32_0 : i32, i32
  }
  func.func @transform_2(%arg0: i32) -> (i32, i32) {
    %c0_i32 = arith.constant 0 : i32
    %c0_i32_0 = arith.constant 0 : i32
    %c0_i32_1 = arith.constant 0 : i32
    return %c0_i32, %c0_i32_0 : i32, i32
  }
  func.func @transform_3(%arg0: i32) -> i32 {
    %c0_i32 = arith.constant 0 : i32
    %c0_i32_0 = arith.constant 0 : i32
    return %c0_i32 : i32
  }
  func.func @transform_4(%arg0: i32) -> (i32, i32) {
    %c0_i32 = arith.constant 0 : i32
    %c0_i32_0 = arith.constant 0 : i32
    return %c0_i32, %arg0 : i32, i32
  }
}

</mosaic_0001>

<llo_original>
// kernel: squeeze.2
$region0: #{squeeze.2}
  %s0 = inlined_call_operand.vmem [shape: f32[2,16,3,1], index: 0, kind: input, shape index: {}]
  %s1 = inlined_call_operand.vmem [shape: f32[32,3], index: 1, kind: output, shape index: {}]
  $region1: #{squeeze.2} parent=0
    #allocation0 [shape = 'u8[4096]{0}', space=vmem, size = 0x1000, scoped, tag = 'scoped mem for output reshape']
    #allocation1 [shape = 'u8[12288]{0}', space=vmem, size = 0x3000, scoped, tag = 'scoped mem for input reshape']
    %s3 = sshllo.u32 0, 2
    %s4 = smul.addr 2, 2
    %s5 = scalar_lea.vmem %s0, %s4
    %v6 = vld [vmem:[%s5] sm:%s3]
    %s7 = scalar_lea.vmem [#allocation1], 16
    %8 = vst [vmem:[%s7] sm:%s3] %v6
    %s9 = scalar_lea.vmem %s0, 2
    %v10 = vld [vmem:[%s9] sm:%s3]
    %s11 = scalar_lea.vmem [#allocation1], 8
    %12 = vst [vmem:[%s11] sm:%s3] %v10
    %v13 = vld [vmem:[%s0] sm:%s3]
    %14 = vst [vmem:[#allocation1] sm:%s3] %v13
    %v15 = vld [vmem:[#allocation1] ss:$8 sm:$0x7]
    %vm16 = vcmask 130048
    %17 = vst.msk [vmem:[#allocation0] sm:$0x7] %vm16, %v15
    %s18 = scalar_lea.vmem [#allocation1], 1
    %v19 = vld [vmem:[%s18] ss:$8 sm:$0x7]
    %20 = vrot.lane.b32.xlu0 %v19, 16
    %v21 = vpop.permute.xlu0 %20
    %vm22 = vcmask 261248
    %23 = vst.msk [vmem:[#allocation0] sm:$0x7] %vm22, %v21
    %s25 = sshllo.u32 0, 4
    %v27 = vld [vmem:[#allocation0] sm:%s25]
    %s28 = sshllo.u32 0, 4
    %29 = vst [vmem:[%s1] sm:%s28] %v27

// kernel: squeeze.3
$region0: #{squeeze.3}
  %s0 = inlined_call_operand.vmem [shape: f32[32], index: 0, kind: input, shape index: {}]
  %s1 = inlined_call_operand.hbm [shape: f32[2,16,1], index: 1, kind: output, shape index: {}]
  $region1: #{squeeze.3} parent=0
    #allocation0 [shape = 'u8[1024]{0}', space=vmem, size = 0x400, scoped, tag = 'operand span for operand 1']
    #allocation1 [shape = 's32[1]{0}', space=sflag, size = 0x4, scoped, tag = 'scoped memory for squeeze.3']
    #allocation2 [shape = 'u8[4096]{0}', space=vmem, size = 0x1000, scoped, tag = 'scoped mem for output reshape']
    #allocation3 [shape = 'u8[4096]{0}', space=vmem, size = 0x1000, scoped, tag = 'scoped mem for input reshape']
    %2 = vsyncpa [#allocation1], 0
    %s4 = sshllo.u32 0, 1
    %v5 = vld [vmem:[%s0] sm:%s4]
    %6 = vst [vmem:[#allocation3] sm:%s4] %v5
    %v7 = vld [vmem:[#allocation3] sm:$0x1]
    %vm8 = vcmask 130048
    %9 = vst.msk [vmem:[#allocation2] sm:$0x1] %vm8, %v7
    %v10 = vld [vmem:[#allocation3] sm:$0x1]
    %11 = vrot.lane.b32.xlu0 %v10, 112
    %v12 = vpop.permute.xlu0 %11
    %vm13 = vcmask 130048
    %s14 = scalar_lea.vmem [#allocation2], 1
    %15 = vst.msk [vmem:[%s14] sm:$0x1] %vm13, %v12
    %s17 = sshllo.u32 0, 2
    %v19 = vld [vmem:[#allocation2] sm:%s17]
    %s20 = sshllo.u32 0, 2
    %21 = vst [vmem:[#allocation0] sm:%s20] %v19
    %s23 = ssub.s32 32, 32
    %24 = vsyncadd [#allocation1], %s23
    %s26 = sshll.u32 [#allocation0], 4
    %s27 = int_to_ptr.vmem [resolvable:$true] %s26
    %29 = dma.vmem_to_hbm [thread:$0]  %s27, 32, %s1, [#allocation1]
    %30 = dma.done [#allocation1], 32
    %31 = vsyncpa [#allocation1], 1

// kernel: ll_vcap_forward.1
$region0: #{ll_vcap_forward.1}
  #allocation0 [shape = 'u32[]', space=smem, size = 0x4, offset = 0x4, fixed_abs, tag = 'smem constant byte address 0x4 - core index']
  #allocation1 [shape = 'u32[144,128]{1,0:T(1,128)}', space=vmem, size = 0x12000, scoped, tag = 'internal scratch']
  #allocation2 [shape = 'f32[1]{0:T(128)S(6)}', space=smem, size = 0x200, scoped, tag = 'scoped memory for ll_vcap_forward.1']
  %s0 = inlined_call_operand.vmem [shape: f32[4,128], index: 0, kind: input, shape index: {}]
  %s1 = inlined_call_operand.vmem [shape: f32[10,4], index: 1, kind: input, shape index: {}]
  %s2 = inlined_call_operand.vmem [shape: f32[1,10], index: 2, kind: input, shape index: {}]
  %s3 = inlined_call_operand.<no memory space> [shape: f32[1], index: 3, kind: input, shape index: {}]
  %s4 = inlined_call_operand.vmem [shape: f32[1,128], index: 4, kind: output, shape index: {}]
  %s5 = sld [smem:[#allocation0]]
  $region26: #{ll_vcap_forward.1} parent=0
    _
  %s7 = ssub.s32 1, %s5
  %s8 = scalar_select 0, %s7, %s5
  %9 = sst [smem:[#allocation2]] %s3
  // Predicated region
  $region2: #{ll_vcap_forward.1} parent=0 // pred_check
    _
  $region3: #{ll_vcap_forward.1} parent=0 // pred_check_branch
    %11 = sbr.rel (0) target = $region5
  $region4: #{ll_vcap_forward.1} parent=0 // pred_region
    _
  $region5: #{ll_vcap_forward.1} parent=0 // pred_fallthru
    _
  // Predicated region
  $region6: #{ll_vcap_forward.1} parent=0 // pred_check
    _
  $region7: #{ll_vcap_forward.1} parent=0 // pred_check_branch
    %13 = sbr.rel (0) target = $region9
  $region8: #{ll_vcap_forward.1} parent=0 // pred_region
    _
  $region9: #{ll_vcap_forward.1} parent=0 // pred_fallthru
    _
  // Predicated region
  $region10: #{ll_vcap_forward.1} parent=0 // pred_check
    _
  $region11: #{ll_vcap_forward.1} parent=0 // pred_check_branch
    %15 = sbr.rel (0) target = $region13
  $region12: #{ll_vcap_forward.1} parent=0 // pred_region
    _
  $region13: #{ll_vcap_forward.1} parent=0 // pred_fallthru
    _
  // Predicated region
  $region14: #{ll_vcap_forward.1} parent=0 // pred_check
    _
  $region15: #{ll_vcap_forward.1} parent=0 // pred_check_branch
    %17 = sbr.rel (0) target = $region17
  $region16: #{ll_vcap_forward.1} parent=0 // pred_region
    _
  $region17: #{ll_vcap_forward.1} parent=0 // pred_fallthru
    _
  %v18 = vld [vmem:[%s1] sm:$0xff]
  %v19 = vld [vmem:[%s1 + $0x8] sm:$0x3]
  %v20 = vld [vmem:[%s0] sm:$0xf]
  %vm21 = vcmask 31744
  %v23 = vsel %vm21, %v18, 0
  %v26 = vsel %vm21, %v19, 0
  %vm28 = vcmask 1043456
  %v30 = vsel %vm28, %v20, 0
  %32 = vmatprep.subr.mxu0 0.0
  %33 = vmatpush1.msra.mxu0 %v30
  %34 = vmatprep.subr.mxu0 0.0
  %35 = vmatpush1.msra.mxu0 0.0
  %36 = vmatprep.subr.mxu0 0.0
  %37 = vmatpush1.msra.mxu0 0.0
  %38 = vmatprep.subr.mxu0 0.0
  %39 = vmatpush1.msra.mxu0 0.0
  %40 = vmatprep.subr.mxu0 0.0
  %41 = vmatpush1.msra.mxu0 0.0
  %42 = vmatprep.subr.mxu0 0.0
  %43 = vmatpush1.msra.mxu0 0.0
  %44 = vmatprep.subr.mxu0 0.0
  %45 = vmatpush1.msra.mxu0 0.0
  %46 = vmatprep.subr.mxu0 0.0
  %47 = vmatpush1.msra.mxu0 0.0
  %48 = vmatprep.subr.mxu0 0.0
  %49 = vmatpush1.msra.mxu0 0.0
  %50 = vmatprep.subr.mxu0 0.0
  %51 = vmatpush1.msra.mxu0 0.0
  %52 = vmatprep.subr.mxu0 0.0
  %53 = vmatpush1.msra.mxu0 0.0
  %54 = vmatprep.subr.mxu0 0.0
  %55 = vmatpush1.msra.mxu0 0.0
  %56 = vmatprep.subr.mxu0 0.0
  %57 = vmatpush1.msra.mxu0 0.0
  %58 = vmatprep.subr.mxu0 0.0
  %59 = vmatpush1.msra.mxu0 0.0
  %60 = vmatprep.subr.mxu0 0.0
  %61 = vmatpush1.msra.mxu0 0.0
  %62 = vmatprep.subr.mxu0 0.0
  %63 = vmatpush1.msra.mxu0 0.0
  %64 = vmatprep.subr.mxu0 0.0
  %65 = vmatpush1.msra.mxu0 0.0
  %66 = vmatprep.subr.mxu0 0.0
  %67 = vmatpush1.msra.mxu0 0.0
  %68 = vmatprep.subr.mxu0 0.0
  %69 = vmatpush1.msra.mxu0 0.0
  %70 = vmatprep.subr.mxu0 0.0
  %71 = vmatpush1.msra.mxu0 0.0
  %72 = vmatprep.subr.mxu0 0.0
  %73 = vmatpush1.msra.mxu0 0.0
  %74 = vmatprep.subr.mxu0 0.0
  %75 = vmatpush1.msra.mxu0 0.0
  %76 = vmatprep.subr.mxu0 0.0
  %77 = vmatpush1.msra.mxu0 0.0
  %78 = vmatprep.subr.mxu0 0.0
  %79 = vmatpush1.msra.mxu0 0.0
  %80 = vmatprep.subr.mxu0 0.0
  %81 = vmatpush1.msra.mxu0 0.0
  %82 = vmatprep.subr.mxu0 0.0
  %83 = vmatpush1.msra.mxu0 0.0
  %84 = vmatprep.subr.mxu0 0.0
  %85 = vmatpush1.msra.mxu0 0.0
  %86 = vmatprep.subr.mxu0 0.0
  %87 = vmatpush1.msra.mxu0 0.0
  %88 = vmatprep.subr.mxu0 0.0
  %89 = vmatpush1.msra.mxu0 0.0
  %90 = vmatprep.subr.mxu0 0.0
  %91 = vmatpush1.msra.mxu0 0.0
  %92 = vmatprep.subr.mxu0 0.0
  %93 = vmatpush1.msra.mxu0 0.0
  %94 = vmatprep.subr.mxu0 0.0
  %95 = vmatpush1.msra.mxu0 0.0
  %96 = vmatprep.mubr.f32.mxu0 0.0
  %97 = vmatmul.mubr.f32.gmra.mrb[0].mxu0 %v23
  %v98 = vpop.f32.mrb[0].mxu0
  %v99 = vadd.f32 0.0, %v98
  %v100 = vpop.f32.mrb[0].mxu0
  %101 = vmatprep.mubr.f32.mxu0 0.0
  %102 = vmatmul.mubr.f32.gmra.mrb[0].mxu0 %v26
  %v103 = vpop.f32.mrb[0].mxu0
  %v104 = vadd.f32 0.0, %v103
  %v105 = vpop.f32.mrb[0].mxu0
  %106 = vdwg.mxu0
  %v107 = vmax.f32 %v99, 0.0
  %v108 = vmax.f32 %v104, 0.0
  %v109 = vld [vmem:[%s2] sm:$0x1]
  %s110 = sld [smem:[#allocation2]]
  %v111 = vstv %s110
  %vm112 = vcmask 80896
  %v114 = vsel %vm112, %v109, 0
  %vm116 = vcmask 1041408
  %v118 = vsel %vm116, %v108, 0
  %120 = vmatprep.subr.mxu0 0.0
  %121 = vmatpush1.msra.mxu0 %v107
  %122 = vmatprep.subr.mxu0 0.0
  %123 = vmatpush1.msra.mxu0 %v118
  %124 = vmatprep.subr.mxu0 0.0
  %125 = vmatpush1.msra.mxu0 0.0
  %126 = vmatprep.subr.mxu0 0.0
  %127 = vmatpush1.msra.mxu0 0.0
  %128 = vmatprep.subr.mxu0 0.0
  %129 = vmatpush1.msra.mxu0 0.0
  %130 = vmatprep.subr.mxu0 0.0
  %131 = vmatpush1.msra.mxu0 0.0
  %132 = vmatprep.subr.mxu0 0.0
  %133 = vmatpush1.msra.mxu0 0.0
  %134 = vmatprep.subr.mxu0 0.0
  %135 = vmatpush1.msra.mxu0 0.0
  %136 = vmatprep.subr.mxu0 0.0
  %137 = vmatpush1.msra.mxu0 0.0
  %138 = vmatprep.subr.mxu0 0.0
  %139 = vmatpush1.msra.mxu0 0.0
  %140 = vmatprep.subr.mxu0 0.0
  %141 = vmatpush1.msra.mxu0 0.0
  %142 = vmatprep.subr.mxu0 0.0
  %143 = vmatpush1.msra.mxu0 0.0
  %144 = vmatprep.subr.mxu0 0.0
  %145 = vmatpush1.msra.mxu0 0.0
  %146 = vmatprep.subr.mxu0 0.0
  %147 = vmatpush1.msra.mxu0 0.0
  %148 = vmatprep.subr.mxu0 0.0
  %149 = vmatpush1.msra.mxu0 0.0
  %150 = vmatprep.subr.mxu0 0.0
  %151 = vmatpush1.msra.mxu0 0.0
  %152 = vmatprep.subr.mxu0 0.0
  %153 = vmatpush1.msra.mxu0 0.0
  %154 = vmatprep.subr.mxu0 0.0
  %155 = vmatpush1.msra.mxu0 0.0
  %156 = vmatprep.subr.mxu0 0.0
  %157 = vmatpush1.msra.mxu0 0.0
  %158 = vmatprep.subr.mxu0 0.0
  %159 = vmatpush1.msra.mxu0 0.0
  %160 = vmatprep.subr.mxu0 0.0
  %161 = vmatpush1.msra.mxu0 0.0
  %162 = vmatprep.subr.mxu0 0.0
  %163 = vmatpush1.msra.mxu0 0.0
  %164 = vmatprep.subr.mxu0 0.0
  %165 = vmatpush1.msra.mxu0 0.0
  %166 = vmatprep.subr.mxu0 0.0
  %167 = vmatpush1.msra.mxu0 0.0
  %168 = vmatprep.subr.mxu0 0.0
  %169 = vmatpush1.msra.mxu0 0.0
  %170 = vmatprep.subr.mxu0 0.0
  %171 = vmatpush1.msra.mxu0 0.0
  %172 = vmatprep.subr.mxu0 0.0
  %173 = vmatpush1.msra.mxu0 0.0
  %174 = vmatprep.subr.mxu0 0.0
  %175 = vmatpush1.msra.mxu0 0.0
  %176 = vmatprep.subr.mxu0 0.0
  %177 = vmatpush1.msra.mxu0 0.0
  %178 = vmatprep.subr.mxu0 0.0
  %179 = vmatpush1.msra.mxu0 0.0
  %180 = vmatprep.subr.mxu0 0.0
  %181 = vmatpush1.msra.mxu0 0.0
  %182 = vmatprep.subr.mxu0 0.0
  %183 = vmatpush1.msra.mxu0 0.0
  %184 = vmatprep.mubr.f32.mxu0 0.0
  %185 = vmatmul.mubr.f32.gmra.mrb[0].mxu0 %v114
  %v186 = vpop.f32.mrb[0].mxu0
  %v187 = vadd.f32 %v111, %v186
  %v188 = vpop.f32.mrb[0].mxu0
  %189 = vdwg.mxu0
  %190 = vst [vmem:[%s4] sm:$0x1] %v187
  // Predicated region
  $region18: #{ll_vcap_forward.1} parent=0 // pred_check
    _
  $region19: #{ll_vcap_forward.1} parent=0 // pred_check_branch
    %192 = sbr.rel (0) target = $region21
  $region20: #{ll_vcap_forward.1} parent=0 // pred_region
    _
  $region21: #{ll_vcap_forward.1} parent=0 // pred_fallthru
    _
  // Predicated region
  $region22: #{ll_vcap_forward.1} parent=0 // pred_check
    _
  $region23: #{ll_vcap_forward.1} parent=0 // pred_check_branch
    %194 = sbr.rel (0) target = $region25
  $region24: #{ll_vcap_forward.1} parent=0 // pred_region
    _
  $region25: #{ll_vcap_forward.1} parent=0 // pred_fallthru
    _

</llo_original>
